<compile_context>
chip_gen: v6e
topology: v6e:2x2x1
jax: 0.10.0
libtpu: 0.0.40
codegen_flags: <defaults>
</compile_context>

<pallas_src>
import jax
import jax.numpy as jnp
from jax.experimental import pallas as pl
from jax.experimental.pallas import tpu as pltpu


def _conv_taps_relu_kernel(p_ref, w_ref, o_ref):
    # p_ref: (K, TM)   transposed im2col patches tile (lane-dense along M)
    # w_ref: (Cout, K) conv weights
    # o_ref: (Cout, TM) lane-dense output tile
    p = p_ref[...]                      # (K, TM)   ~2 dense f32 vregs
    w = w_ref[...]                      # (Cout, K)
    k_taps = w.shape[1]
    acc = jnp.zeros(o_ref.shape, jnp.float32)
    for k in range(k_taps):             # static unroll: 9 VPU broadcast-FMAs
        acc = acc + w[:, k:k + 1] * p[k:k + 1, :]
    o_ref[...] = jnp.maximum(acc, 0.0).astype(o_ref.dtype)


def conv2d_relu_pallas(x, weight, stride=2, tm=128):
    """x: (N, Cin, H, W) float32; weight: (Cout, Cin, KH, KW) float32
    -> (N, Cout, Ho, Wo) float32 (Conv2d(stride, no padding, no bias) + ReLU)."""
    N, Cin, H, W = x.shape
    Cout, Cin_w, KH, KW = weight.shape
    assert Cin == Cin_w
    Ho = (H - KH) // stride + 1
    Wo = (W - KW) // stride + 1

    K = Cin * KH * KW
    M = N * Ho * Wo

    # --- im2col, already transposed to (K, M) so the kernel sees lane-dense M ---
    # tap ordering (c, kh, kw) matches weight.reshape(Cout, Cin*KH*KW)
    cols = []
    for c in range(Cin):
        for kh in range(KH):
            for kw in range(KW):
                cols.append(
                    x[:, c,
                      kh:kh + stride * (Ho - 1) + 1:stride,
                      kw:kw + stride * (Wo - 1) + 1:stride])   # (N, Ho, Wo)
    patches_t = jnp.stack(cols, axis=0).reshape(K, M)          # (K, M)

    # pad M up to a multiple of 128 so lane dim is aligned / unmasked
    M_pad = ((M + tm - 1) // tm) * tm
    if M_pad != M:
        patches_t = jnp.pad(patches_t, ((0, 0), (0, M_pad - M)))

    w_mat = weight.reshape(Cout, K)                            # (Cout, K)

    grid_m = M_pad // tm
    out_t = pl.pallas_call(
        _conv_taps_relu_kernel,
        out_shape=jax.ShapeDtypeStruct((Cout, M_pad), jnp.float32),
        grid_spec=pltpu.PrefetchScalarGridSpec(
            num_scalar_prefetch=0,
            grid=(grid_m,),
            in_specs=[
                pl.BlockSpec((K, tm), lambda i: (0, i)),      # patches^T tile
                pl.BlockSpec((Cout, K), lambda i: (0, 0)),    # weights (tiny)
            ],
            out_specs=pl.BlockSpec((Cout, tm), lambda i: (0, i)),
        ),
        compiler_params=pltpu.CompilerParams(
            dimension_semantics=("parallel",)),                # shards M-tiles on v7x
    )(patches_t, w_mat)

    # (Cout, M) -> (Cout, N, Ho, Wo) -> (N, Cout, Ho, Wo)
    out = out_t[:, :M].reshape(Cout, N, Ho, Wo)
    return jnp.transpose(out, (1, 0, 2, 3))


if __name__ == "__main__":
    key = jax.random.PRNGKey(0)
    kx, kw = jax.random.split(key)

    # input consistent with Conv2d(in_channels=1): N=2, C=1, H=W=16
    x = jax.random.normal(kx, (2, 1, 16, 16), dtype=jnp.float32)
    # Conv2d(1, 8, 3, 2, bias=False) weight: (8, 1, 3, 3), deterministic init
    fan_in = 1 * 3 * 3
    weight = jax.random.uniform(kw, (8, 1, 3, 3), dtype=jnp.float32,
                                minval=-1.0, maxval=1.0) / jnp.sqrt(fan_in)

    out = conv2d_relu_pallas(x, weight, stride=2)
    out = jax.block_until_ready(out)

    # reference check against XLA conv
    ref = jax.lax.conv_general_dilated(
        x, weight, window_strides=(2, 2), padding="VALID",
        dimension_numbers=("NCHW", "OIHW", "NCHW"))
    ref = jnp.maximum(ref, 0.0)
    assert out.shape == (2, 8, 7, 7), out.shape
    assert jnp.allclose(out, ref, atol=1e-5, rtol=1e-5)

    print("KERNEL_OK")
</pallas_src>

<mosaic_0001>
module attributes {stable_mosaic.version = 11 : i64} {
  func.func @_conv_taps_relu_kernel(%arg0: i32, %arg1: memref<9x128xf32, #tpu.memory_space<vmem>>, %arg2: memref<8x9xf32, #tpu.memory_space<vmem>>, %arg3: memref<8x128xf32, #tpu.memory_space<vmem>>) attributes {dimension_semantics = [#tpu.dimension_semantics<parallel>], iteration_bounds = array<i64: 1>, scalar_prefetch = 0 : i64, scratch_operands = 0 : i64, tpu.core_type = #tpu.core_type<tc>, window_params = [{transform_indices = @transform_0, window_bounds = array<i64: 9, 128>}, {pipeline_mode = #tpu.pipeline_mode<synchronous>, transform_indices = @transform_1, window_bounds = array<i64: 8, 9>}, {transform_indices = @transform_2, window_bounds = array<i64: 8, 128>}]} {
    %c0 = arith.constant 0 : index
    %c0_0 = arith.constant 0 : index
    %0 = vector.load %arg1[%c0, %c0_0] : memref<9x128xf32, #tpu.memory_space<vmem>>, vector<9x128xf32>
    %c0_1 = arith.constant 0 : index
    %c0_2 = arith.constant 0 : index
    %1 = vector.load %arg2[%c0_1, %c0_2] : memref<8x9xf32, #tpu.memory_space<vmem>>, vector<8x9xf32>
    %cst = arith.constant 0.000000e+00 : f32
    %2 = vector.broadcast %cst : f32 to vector<8x128xf32>
    %3 = vector.extract_strided_slice %1 {offsets = [0, 0], sizes = [8, 1], strides = [1, 1]} : vector<8x9xf32> to vector<8x1xf32>
    %4 = vector.extract_strided_slice %0 {offsets = [0, 0], sizes = [1, 128], strides = [1, 1]} : vector<9x128xf32> to vector<1x128xf32>
    %5 = vector.broadcast %3 : vector<8x1xf32> to vector<8x128xf32>
    %6 = vector.broadcast %4 : vector<1x128xf32> to vector<8x128xf32>
    %7 = arith.mulf %5, %6 : vector<8x128xf32>
    %8 = arith.addf %2, %7 : vector<8x128xf32>
    %9 = vector.extract_strided_slice %1 {offsets = [0, 1], sizes = [8, 1], strides = [1, 1]} : vector<8x9xf32> to vector<8x1xf32>
    %10 = vector.extract_strided_slice %0 {offsets = [1, 0], sizes = [1, 128], strides = [1, 1]} : vector<9x128xf32> to vector<1x128xf32>
    %11 = vector.broadcast %9 : vector<8x1xf32> to vector<8x128xf32>
    %12 = vector.broadcast %10 : vector<1x128xf32> to vector<8x128xf32>
    %13 = arith.mulf %11, %12 : vector<8x128xf32>
    %14 = arith.addf %8, %13 : vector<8x128xf32>
    %15 = vector.extract_strided_slice %1 {offsets = [0, 2], sizes = [8, 1], strides = [1, 1]} : vector<8x9xf32> to vector<8x1xf32>
    %16 = vector.extract_strided_slice %0 {offsets = [2, 0], sizes = [1, 128], strides = [1, 1]} : vector<9x128xf32> to vector<1x128xf32>
    %17 = vector.broadcast %15 : vector<8x1xf32> to vector<8x128xf32>
    %18 = vector.broadcast %16 : vector<1x128xf32> to vector<8x128xf32>
    %19 = arith.mulf %17, %18 : vector<8x128xf32>
    %20 = arith.addf %14, %19 : vector<8x128xf32>
    %21 = vector.extract_strided_slice %1 {offsets = [0, 3], sizes = [8, 1], strides = [1, 1]} : vector<8x9xf32> to vector<8x1xf32>
    %22 = vector.extract_strided_slice %0 {offsets = [3, 0], sizes = [1, 128], strides = [1, 1]} : vector<9x128xf32> to vector<1x128xf32>
    %23 = vector.broadcast %21 : vector<8x1xf32> to vector<8x128xf32>
    %24 = vector.broadcast %22 : vector<1x128xf32> to vector<8x128xf32>
    %25 = arith.mulf %23, %24 : vector<8x128xf32>
    %26 = arith.addf %20, %25 : vector<8x128xf32>
    %27 = vector.extract_strided_slice %1 {offsets = [0, 4], sizes = [8, 1], strides = [1, 1]} : vector<8x9xf32> to vector<8x1xf32>
    %28 = vector.extract_strided_slice %0 {offsets = [4, 0], sizes = [1, 128], strides = [1, 1]} : vector<9x128xf32> to vector<1x128xf32>
    %29 = vector.broadcast %27 : vector<8x1xf32> to vector<8x128xf32>
    %30 = vector.broadcast %28 : vector<1x128xf32> to vector<8x128xf32>
    %31 = arith.mulf %29, %30 : vector<8x128xf32>
    %32 = arith.addf %26, %31 : vector<8x128xf32>
    %33 = vector.extract_strided_slice %1 {offsets = [0, 5], sizes = [8, 1], strides = [1, 1]} : vector<8x9xf32> to vector<8x1xf32>
    %34 = vector.extract_strided_slice %0 {offsets = [5, 0], sizes = [1, 128], strides = [1, 1]} : vector<9x128xf32> to vector<1x128xf32>
    %35 = vector.broadcast %33 : vector<8x1xf32> to vector<8x128xf32>
    %36 = vector.broadcast %34 : vector<1x128xf32> to vector<8x128xf32>
    %37 = arith.mulf %35, %36 : vector<8x128xf32>
    %38 = arith.addf %32, %37 : vector<8x128xf32>
    %39 = vector.extract_strided_slice %1 {offsets = [0, 6], sizes = [8, 1], strides = [1, 1]} : vector<8x9xf32> to vector<8x1xf32>
    %40 = vector.extract_strided_slice %0 {offsets = [6, 0], sizes = [1, 128], strides = [1, 1]} : vector<9x128xf32> to vector<1x128xf32>
    %41 = vector.broadcast %39 : vector<8x1xf32> to vector<8x128xf32>
    %42 = vector.broadcast %40 : vector<1x128xf32> to vector<8x128xf32>
    %43 = arith.mulf %41, %42 : vector<8x128xf32>
    %44 = arith.addf %38, %43 : vector<8x128xf32>
    %45 = vector.extract_strided_slice %1 {offsets = [0, 7], sizes = [8, 1], strides = [1, 1]} : vector<8x9xf32> to vector<8x1xf32>
    %46 = vector.extract_strided_slice %0 {offsets = [7, 0], sizes = [1, 128], strides = [1, 1]} : vector<9x128xf32> to vector<1x128xf32>
    %47 = vector.broadcast %45 : vector<8x1xf32> to vector<8x128xf32>
    %48 = vector.broadcast %46 : vector<1x128xf32> to vector<8x128xf32>
    %49 = arith.mulf %47, %48 : vector<8x128xf32>
    %50 = arith.addf %44, %49 : vector<8x128xf32>
    %51 = vector.extract_strided_slice %1 {offsets = [0, 8], sizes = [8, 1], strides = [1, 1]} : vector<8x9xf32> to vector<8x1xf32>
    %52 = vector.extract_strided_slice %0 {offsets = [8, 0], sizes = [1, 128], strides = [1, 1]} : vector<9x128xf32> to vector<1x128xf32>
    %53 = vector.broadcast %51 : vector<8x1xf32> to vector<8x128xf32>
    %54 = vector.broadcast %52 : vector<1x128xf32> to vector<8x128xf32>
    %55 = arith.mulf %53, %54 : vector<8x128xf32>
    %56 = arith.addf %50, %55 : vector<8x128xf32>
    %cst_3 = arith.constant 0.000000e+00 : f32
    %57 = vector.broadcast %cst_3 : f32 to vector<8x128xf32>
    %58 = arith.maximumf %56, %57 : vector<8x128xf32>
    %c0_4 = arith.constant 0 : index
    %c0_5 = arith.constant 0 : index
    %59 = vector.load %arg3[%c0_4, %c0_5] : memref<8x128xf32, #tpu.memory_space<vmem>>, vector<8x128xf32>
    tpu.vector_store %arg3[%c0_4, %c0_5], %58 {strides = array<i32>} : memref<8x128xf32, #tpu.memory_space<vmem>>, vector<8x128xf32>,
    return
  }
  func.func @transform_0(%arg0: i32) -> (i32, i32) {
    %c0_i32 = arith.constant 0 : i32
    %c0_i32_0 = arith.constant 0 : i32
    return %c0_i32, %arg0 : i32, i32
  }
  func.func @transform_1(%arg0: i32) -> (i32, i32) {
    %c0_i32 = arith.constant 0 : i32
    %c0_i32_0 = arith.constant 0 : i32
    %c0_i32_1 = arith.constant 0 : i32
    return %c0_i32, %c0_i32_0 : i32, i32
  }
  func.func @transform_2(%arg0: i32) -> (i32, i32) {
    %c0_i32 = arith.constant 0 : i32
    %c0_i32_0 = arith.constant 0 : i32
    return %c0_i32, %arg0 : i32, i32
  }
}

</mosaic_0001>

<llo_original>
// kernel: tpu_custom_call.1
$region0: #{tpu_custom_call.1}
  #allocation0 [shape = 'u32[]', space=smem, size = 0x4, offset = 0x4, fixed_abs, tag = 'smem constant byte address 0x4 - core index']
  #allocation1 [shape = 'u32[144,128]{1,0:T(1,128)}', space=vmem, size = 0x12000, scoped, tag = 'internal scratch']
  %s0 = inlined_call_operand.hbm [shape: f32[9,128], index: 0, kind: input, shape index: {}]
  %s1 = inlined_call_operand.hbm [shape: f32[8,9], index: 1, kind: input, shape index: {}]
  %s2 = inlined_call_operand.hbm [shape: f32[8,128], index: 2, kind: output, shape index: {}]
  %s3 = sld [smem:[#allocation0]]
  $region26: #{tpu_custom_call.1} parent=0
    _
  %s5 = ssub.s32 1, %s3
  %s6 = scalar_select 0, %s5, %s3
  $region1: #{tpu_custom_call.1} parent=0
    #allocation2 [shape = 'u8[8192]{0}', space=vmem, size = 0x2000, scoped, tag = 'input window, operand 0, single buffered']
    #allocation3 [shape = 's32[1]{0}', space=sflag, size = 0x4, scoped, tag = 'scoped memory for tpu_custom_call.1']
    #allocation4 [shape = 's32[1]{0}', space=sflag, size = 0x4, scoped, tag = 'scoped memory for tpu_custom_call.1']
    #allocation5 [shape = 'u8[4096]{0}', space=vmem, size = 0x1000, scoped, tag = 'input window, operand 1, single buffered']
    #allocation6 [shape = 's32[1]{0}', space=sflag, size = 0x4, scoped, tag = 'scoped memory for tpu_custom_call.1']
    #allocation7 [shape = 'u8[4096]{0}', space=vmem, size = 0x1000, scoped, tag = 'output window, operand 0, single buffered']
    %7 = vsyncpa [#allocation3], 0
    %8 = vsyncpa [#allocation6], 0
    %9 = vsyncpa [#allocation4], 0
    // Predicated region
    $region2: #{tpu_custom_call.1} parent=1 // pred_check
      _
    $region3: #{tpu_custom_call.1} parent=1 // pred_check_branch
      %11 = sbr.rel (0) target = $region5
    $region4: #{tpu_custom_call.1} parent=1 // pred_region
      %s13 = ssub.s32 256, 256
      %14 = vsyncadd [#allocation3], %s13
      %s15 = sshll.u32 [#allocation2], 4
      %s16 = int_to_ptr.vmem [resolvable:$true] %s15
      %21 = dma.hbm_to_vmem [thread:$0]  %s0, 256, %s16, [#allocation3], 128, 128, 8
    $region5: #{tpu_custom_call.1} parent=1 // pred_fallthru
      _
    // Predicated region
    $region6: #{tpu_custom_call.1} parent=1 // pred_check
      _
    $region7: #{tpu_custom_call.1} parent=1 // pred_check_branch
      %23 = sbr.rel (0) target = $region9
    $region8: #{tpu_custom_call.1} parent=1 // pred_region
      %s25 = ssub.s32 128, 128
      %26 = vsyncadd [#allocation6], %s25
      %s28 = sshll.u32 [#allocation5], 4
      %s29 = int_to_ptr.vmem [resolvable:$true] %s28
      %31 = dma.hbm_to_vmem [thread:$0]  %s1, 128, %s29, [#allocation6]
    $region9: #{tpu_custom_call.1} parent=1 // pred_fallthru
      _
    // Predicated region
    $region10: #{tpu_custom_call.1} parent=1 // pred_check
      _
    $region11: #{tpu_custom_call.1} parent=1 // pred_check_branch
      %33 = sbr.rel (0) target = $region13
    $region12: #{tpu_custom_call.1} parent=1 // pred_region
      %34 = dma.done [#allocation3], 256
    $region13: #{tpu_custom_call.1} parent=1 // pred_fallthru
      _
    // Predicated region
    $region14: #{tpu_custom_call.1} parent=1 // pred_check
      _
    $region15: #{tpu_custom_call.1} parent=1 // pred_check_branch
      %36 = sbr.rel (0) target = $region17
    $region16: #{tpu_custom_call.1} parent=1 // pred_region
      %37 = dma.done [#allocation6], 128
    $region17: #{tpu_custom_call.1} parent=1 // pred_fallthru
      _
    %v38 = vld [vmem:[#allocation2] sm:$0xff]
    %v39 = vld [vmem:[#allocation2 + $0x8] sm:$0x1]
    %v40 = vld [vmem:[#allocation5] sm:$0xff]
    %42 = vset.pattern.permute.xlu0 0
    %43 = vperm.xlu0 %42, %v40
    %v44 = vpop.permute.xlu0 %43
    %v46 = vlaneseq
    %v47 = vshrl.u32 %v46, 7
    %v48 = vsub.s32 0, %v47
    %v49 = vrot.slane %v38, %v48
    %v50 = vmul.f32 %v44, %v49
    %v51 = vadd.f32 %v50, 0.0
    %52 = vset.pattern.permute.xlu0 1
    %53 = vperm.xlu0 %52, %v40
    %v54 = vpop.permute.xlu0 %53
    %v56 = vlaneseq
    %v57 = vshrl.u32 %v56, 7
    %v58 = vsub.s32 1, %v57
    %v59 = vrot.slane %v38, %v58
    %v60 = vmul.f32 %v54, %v59
    %v61 = vadd.f32 %v51, %v60
    %62 = vset.pattern.permute.xlu0 2
    %63 = vperm.xlu0 %62, %v40
    %v64 = vpop.permute.xlu0 %63
    %v66 = vlaneseq
    %v67 = vshrl.u32 %v66, 7
    %v68 = vsub.s32 2, %v67
    %v69 = vrot.slane %v38, %v68
    %v70 = vmul.f32 %v64, %v69
    %v71 = vadd.f32 %v61, %v70
    %72 = vset.pattern.permute.xlu0 3
    %73 = vperm.xlu0 %72, %v40
    %v74 = vpop.permute.xlu0 %73
    %v76 = vlaneseq
    %v77 = vshrl.u32 %v76, 7
    %v78 = vsub.s32 3, %v77
    %v79 = vrot.slane %v38, %v78
    %v80 = vmul.f32 %v74, %v79
    %v81 = vadd.f32 %v71, %v80
    %82 = vset.pattern.permute.xlu0 4
    %83 = vperm.xlu0 %82, %v40
    %v84 = vpop.permute.xlu0 %83
    %v86 = vlaneseq
    %v87 = vshrl.u32 %v86, 7
    %v88 = vsub.s32 4, %v87
    %v89 = vrot.slane %v38, %v88
    %v90 = vmul.f32 %v84, %v89
    %v91 = vadd.f32 %v81, %v90
    %92 = vset.pattern.permute.xlu0 5
    %93 = vperm.xlu0 %92, %v40
    %v94 = vpop.permute.xlu0 %93
    %v96 = vlaneseq
    %v97 = vshrl.u32 %v96, 7
    %v98 = vsub.s32 5, %v97
    %v99 = vrot.slane %v38, %v98
    %v100 = vmul.f32 %v94, %v99
    %v101 = vadd.f32 %v91, %v100
    %102 = vset.pattern.permute.xlu0 6
    %103 = vperm.xlu0 %102, %v40
    %v104 = vpop.permute.xlu0 %103
    %v106 = vlaneseq
    %v107 = vshrl.u32 %v106, 7
    %v108 = vsub.s32 6, %v107
    %v109 = vrot.slane %v38, %v108
    %v110 = vmul.f32 %v104, %v109
    %v111 = vadd.f32 %v101, %v110
    %112 = vset.pattern.permute.xlu0 7
    %113 = vperm.xlu0 %112, %v40
    %v114 = vpop.permute.xlu0 %113
    %v116 = vlaneseq
    %v117 = vshrl.u32 %v116, 7
    %v118 = vsub.s32 7, %v117
    %v119 = vrot.slane %v38, %v118
    %v120 = vmul.f32 %v114, %v119
    %v121 = vadd.f32 %v111, %v120
    %122 = vset.pattern.permute.xlu0 8
    %123 = vperm.xlu0 %122, %v40
    %v124 = vpop.permute.xlu0 %123
    %v126 = vlaneseq
    %v127 = vshrl.u32 %v126, 7
    %v128 = vsub.s32 0, %v127
    %v129 = vrot.slane %v39, %v128
    %v130 = vmul.f32 %v124, %v129
    %v131 = vadd.f32 %v121, %v130
    %v132 = vmax.f32 %v131, 0.0
    %133 = vst [vmem:[#allocation7] sm:$0xff] %v132
    // Predicated region
    $region18: #{tpu_custom_call.1} parent=1 // pred_check
      _
    $region19: #{tpu_custom_call.1} parent=1 // pred_check_branch
      %135 = sbr.rel (0) target = $region21
    $region20: #{tpu_custom_call.1} parent=1 // pred_region
      %s137 = ssub.s32 128, 128
      %138 = vsyncadd [#allocation4], %s137
      %s140 = sshll.u32 [#allocation7], 4
      %s141 = int_to_ptr.vmem [resolvable:$true] %s140
      %143 = dma.vmem_to_hbm [thread:$0]  %s141, 128, %s2, [#allocation4]
    $region21: #{tpu_custom_call.1} parent=1 // pred_fallthru
      _
    // Predicated region
    $region22: #{tpu_custom_call.1} parent=1 // pred_check
      _
    $region23: #{tpu_custom_call.1} parent=1 // pred_check_branch
      %145 = sbr.rel (0) target = $region25
    $region24: #{tpu_custom_call.1} parent=1 // pred_region
      %146 = dma.done [#allocation4], 128
    $region25: #{tpu_custom_call.1} parent=1 // pred_fallthru
      _
    %147 = vsyncpa [#allocation3], 1
    %148 = vsyncpa [#allocation6], 1
    %149 = vsyncpa [#allocation4], 1

</llo_original>
